<compile_context>
chip_gen: v5e
topology: v5e:2x2
jax: 0.10.0
libtpu: 0.0.40
codegen_flags: <defaults>
</compile_context>

<pallas_src>
import functools

import jax
import jax.numpy as jnp
from jax.experimental import pallas as pl
from jax.experimental.pallas import tpu as pltpu


def _embed_gather_kernel(ids_ref, table_hbm, out_ref, buf, sem, *, tokens_per_step):
    """One grid step: gather `tokens_per_step` embedding rows, emit one tile."""
    G = tokens_per_step
    i = pl.program_id(0)
    n_steps = pl.num_programs(0)
    slot = i % 2

    def issue(step, s):
        base = step * G
        for g in range(G):  # G static -> unrolled; G small DMAs in flight at once
            tok = ids_ref[base + g]
            pltpu.make_async_copy(
                table_hbm.at[pl.ds(tok, 1), :],
                buf.at[s, pl.ds(g, 1), :],
                sem.at[s, g],
            ).start()

    def wait(s):
        for g in range(G):
            pltpu.make_async_copy(
                table_hbm.at[pl.ds(0, 1), :],
                buf.at[s, pl.ds(g, 1), :],
                sem.at[s, g],
            ).wait()

    # Prime the pipeline on the first step.
    @pl.when(i == 0)
    def _():
        issue(0, 0)

    # Prefetch next step's rows into the other slot (double buffering).
    @pl.when(i + 1 < n_steps)
    def _():
        issue(i + 1, 1 - slot)

    # Consume the current slot.  Dropout(p=0) is an identity -> full-tile copy.
    wait(slot)
    out_ref[...] = buf[slot]
    # TODO(synk): for p > 0 training-mode dropout, draw a mask with
    # pltpu.prng_seed / pltpu.stateful_bernoulli and scale by 1/(1-p) passed
    # via an SMEM scalar (avoids recompiling per dropout rate).


def embedder_forward(ids, table, dropout_p: float = 0.0):
    """Pallas equivalent of Embedder.forward (inference / p == 0 dropout)."""
    if dropout_p != 0.0:
        # TODO(synk): implement masked dropout path (see kernel TODO).
        raise NotImplementedError("Only dropout_p == 0.0 is implemented.")

    B, S = ids.shape
    V, D = table.shape
    if D % 128 != 0:
        raise ValueError(f"embedding_dim must be a multiple of 128 (got {D}).")

    # 8 f32 rows (16 bf16 rows) per grid step => (8,128)-aligned output tiles.
    itemsize = jnp.dtype(table.dtype).itemsize
    G = 8 * max(1, 4 // itemsize)

    N = B * S
    n_steps = (N + G - 1) // G
    N_pad = n_steps * G

    flat_ids = ids.reshape(N).astype(jnp.int32)
    # Clamp out-of-range ids: cheap insurance against OOB row DMAs.
    flat_ids = jnp.clip(flat_ids, 0, V - 1)
    if N_pad != N:
        # Pad with padding_idx (row 0); padded outputs are sliced off below.
        flat_ids = jnp.concatenate(
            [flat_ids, jnp.zeros((N_pad - N,), jnp.int32)])

    kernel = functools.partial(_embed_gather_kernel, tokens_per_step=G)

    out_flat = pl.pallas_call(
        kernel,
        out_shape=jax.ShapeDtypeStruct((N_pad, D), table.dtype),
        grid_spec=pltpu.PrefetchScalarGridSpec(
            num_scalar_prefetch=1,          # flat_ids -> SMEM before the grid runs
            grid=(n_steps,),
            in_specs=[
                pl.BlockSpec(memory_space=pl.ANY),   # table stays in HBM; manual DMA
            ],
            out_specs=pl.BlockSpec((G, D), lambda i, ids_ref: (i, 0)),
            scratch_shapes=[
                pltpu.VMEM((2, G, D), table.dtype),      # double-buffered row gather
                pltpu.SemaphoreType.DMA((2, G)),
            ],
        ),
        # Scratch state is carried across steps (double buffering), so keep the
        # grid axis "arbitrary" (measured ~0 delta vs "parallel" on 1-TC chips).
        compiler_params=pltpu.CompilerParams(
            dimension_semantics=("arbitrary",),
        ),
    )(flat_ids, table)

    return out_flat[:N].reshape(B, S, D)


def init_embedder_params(key, vocab_size: int, embedding_dim: int = 128):
    """Deterministic nn.Embedding-style init; row 0 zeroed (padding_idx=0)."""
    table = jax.random.normal(key, (vocab_size, embedding_dim), dtype=jnp.float32)
    table = table.at[0].set(0.0)  # padding_idx = 0
    return table


if __name__ == "__main__":
    vocab_size = 32
    embedding_dim = 128
    batch, seq = 2, 8

    key = jax.random.PRNGKey(0)
    k_table, k_ids = jax.random.split(key)

    table = init_embedder_params(k_table, vocab_size, embedding_dim)
    ids = jax.random.randint(k_ids, (batch, seq), 0, vocab_size, dtype=jnp.int32)

    out = embedder_forward(ids, table, dropout_p=0.0)
    out = jax.block_until_ready(out)

    # Reference check against a plain-JAX embedding lookup.
    ref = jnp.take(table, ids, axis=0)
    assert out.shape == (batch, seq, embedding_dim)
    assert jnp.allclose(out, ref), "Pallas embedding mismatch vs reference"

    print("KERNEL_OK")
</pallas_src>

<mosaic_0001>
module attributes {stable_mosaic.version = 11 : i64} {
  func.func @_embed_gather_kernel(%arg0: i32, %arg1: memref<16xi32, #tpu.memory_space<smem>>, %arg2: memref<32x128xf32, #tpu.memory_space<any>>, %arg3: memref<8x128xf32, #tpu.memory_space<vmem>>, %arg4: memref<2x8x128xf32, #tpu.memory_space<vmem>>, %arg5: memref<2x8x!tpu.dma_semaphore, #tpu.memory_space<semaphore_mem>>) attributes {dimension_semantics = [#tpu.dimension_semantics<arbitrary>], iteration_bounds = array<i64: 2>, scalar_prefetch = 1 : i64, scratch_operands = 2 : i64, tpu.core_type = #tpu.core_type<tc>, window_params = [{}, {transform_indices = @transform_1, window_bounds = array<i64: 8, 128>}]} {
    %c2_i32 = arith.constant 2 : i32
    %c0_i32 = arith.constant 0 : i32
    %0 = arith.cmpi eq, %c2_i32, %c0_i32 : i32
    %c1_i32 = arith.constant 1 : i32
    %1 = arith.select %0, %c1_i32, %c2_i32 : i32
    %2 = arith.remsi %arg0, %1 : i32
    %c0_i32_0 = arith.constant 0 : i32
    %3 = arith.cmpi ne, %2, %c0_i32_0 : i32
    %c0_i32_1 = arith.constant 0 : i32
    %4 = arith.cmpi slt, %2, %c0_i32_1 : i32
    %c0_i32_2 = arith.constant 0 : i32
    %5 = arith.cmpi slt, %1, %c0_i32_2 : i32
    %6 = arith.xori %4, %5 : i1
    %7 = arith.andi %6, %3 : i1
    %8 = arith.addi %2, %1 : i32
    %9 = arith.select %7, %8, %2 : i32
    %c0_i32_3 = arith.constant 0 : i32
    %10 = arith.cmpi eq, %arg0, %c0_i32_3 : i32
    %11 = arith.extui %10 : i1 to i32
    %c0_i32_4 = arith.constant 0 : i32
    %12 = arith.cmpi ne, %11, %c0_i32_4 : i32
    scf.if %12 {
      %c0_46 = arith.constant 0 : index
      %61 = memref.load %arg1[%c0_46] : memref<16xi32, #tpu.memory_space<smem>>
      %c0_i32_47 = arith.constant 0 : i32
      %c0_i32_48 = arith.constant 0 : i32
      %c0_i32_49 = arith.constant 0 : i32
      %c0_i32_50 = arith.constant 0 : i32
      %62 = tpu.memref_slice %arg2[%61, %c0_i32_50] : memref<32x128xf32, #tpu.memory_space<any>> -> memref<1x128xf32, #tpu.memory_space<any>>
      %c0_i32_51 = arith.constant 0 : i32
      %c0_i32_52 = arith.constant 0 : i32
      %63 = tpu.memref_slice %arg4[%c0_i32_47, %c0_i32_51, %c0_i32_52] : memref<2x8x128xf32, #tpu.memory_space<vmem>> -> memref<1x1x128xf32, #tpu.memory_space<vmem>>
      %64 = tpu.memref_squeeze %63 : memref<1x1x128xf32, #tpu.memory_space<vmem>> -> memref<1x128xf32, #tpu.memory_space<vmem>>
      %65 = tpu.memref_slice %arg5[%c0_i32_48, %c0_i32_49] : memref<2x8x!tpu.dma_semaphore, #tpu.memory_space<semaphore_mem>> -> memref<1x1x!tpu.dma_semaphore, #tpu.memory_space<semaphore_mem>>
      %66 = tpu.memref_squeeze %65 : memref<1x1x!tpu.dma_semaphore, #tpu.memory_space<semaphore_mem>> -> memref<!tpu.dma_semaphore, #tpu.memory_space<semaphore_mem>>
      tpu.enqueue_dma source(%62 : memref<1x128xf32, #tpu.memory_space<any>>) target(%64 : memref<1x128xf32, #tpu.memory_space<vmem>>) target_semaphore(%66 : memref<!tpu.dma_semaphore, #tpu.memory_space<semaphore_mem>>)
      %c1 = arith.constant 1 : index
      %67 = memref.load %arg1[%c1] : memref<16xi32, #tpu.memory_space<smem>>
      %c0_i32_53 = arith.constant 0 : i32
      %c0_i32_54 = arith.constant 0 : i32
      %c1_i32_55 = arith.constant 1 : i32
      %c0_i32_56 = arith.constant 0 : i32
      %68 = tpu.memref_slice %arg2[%67, %c0_i32_56] : memref<32x128xf32, #tpu.memory_space<any>> -> memref<1x128xf32, #tpu.memory_space<any>>
      %c1_i32_57 = arith.constant 1 : i32
      %c0_i32_58 = arith.constant 0 : i32
      %69 = tpu.memref_slice %arg4[%c0_i32_53, %c1_i32_57, %c0_i32_58] : memref<2x8x128xf32, #tpu.memory_space<vmem>> -> memref<1x1x128xf32, #tpu.memory_space<vmem>>
      %70 = tpu.memref_squeeze %69 : memref<1x1x128xf32, #tpu.memory_space<vmem>> -> memref<1x128xf32, #tpu.memory_space<vmem>>
      %71 = tpu.memref_slice %arg5[%c0_i32_54, %c1_i32_55] : memref<2x8x!tpu.dma_semaphore, #tpu.memory_space<semaphore_mem>> -> memref<1x1x!tpu.dma_semaphore, #tpu.memory_space<semaphore_mem>>
      %72 = tpu.memref_squeeze %71 : memref<1x1x!tpu.dma_semaphore, #tpu.memory_space<semaphore_mem>> -> memref<!tpu.dma_semaphore, #tpu.memory_space<semaphore_mem>>
      tpu.enqueue_dma source(%68 : memref<1x128xf32, #tpu.memory_space<any>>) target(%70 : memref<1x128xf32, #tpu.memory_space<vmem>>) target_semaphore(%72 : memref<!tpu.dma_semaphore, #tpu.memory_space<semaphore_mem>>)
      %c2 = arith.constant 2 : index
      %73 = memref.load %arg1[%c2] : memref<16xi32, #tpu.memory_space<smem>>
      %c0_i32_59 = arith.constant 0 : i32
      %c0_i32_60 = arith.constant 0 : i32
      %c2_i32_61 = arith.constant 2 : i32
      %c0_i32_62 = arith.constant 0 : i32
      %74 = tpu.memref_slice %arg2[%73, %c0_i32_62] : memref<32x128xf32, #tpu.memory_space<any>> -> memref<1x128xf32, #tpu.memory_space<any>>
      %c2_i32_63 = arith.constant 2 : i32
      %c0_i32_64 = arith.constant 0 : i32
      %75 = tpu.memref_slice %arg4[%c0_i32_59, %c2_i32_63, %c0_i32_64] : memref<2x8x128xf32, #tpu.memory_space<vmem>> -> memref<1x1x128xf32, #tpu.memory_space<vmem>>
      %76 = tpu.memref_squeeze %75 : memref<1x1x128xf32, #tpu.memory_space<vmem>> -> memref<1x128xf32, #tpu.memory_space<vmem>>
      %77 = tpu.memref_slice %arg5[%c0_i32_60, %c2_i32_61] : memref<2x8x!tpu.dma_semaphore, #tpu.memory_space<semaphore_mem>> -> memref<1x1x!tpu.dma_semaphore, #tpu.memory_space<semaphore_mem>>
      %78 = tpu.memref_squeeze %77 : memref<1x1x!tpu.dma_semaphore, #tpu.memory_space<semaphore_mem>> -> memref<!tpu.dma_semaphore, #tpu.memory_space<semaphore_mem>>
      tpu.enqueue_dma source(%74 : memref<1x128xf32, #tpu.memory_space<any>>) target(%76 : memref<1x128xf32, #tpu.memory_space<vmem>>) target_semaphore(%78 : memref<!tpu.dma_semaphore, #tpu.memory_space<semaphore_mem>>)
      %c3 = arith.constant 3 : index
      %79 = memref.load %arg1[%c3] : memref<16xi32, #tpu.memory_space<smem>>
      %c0_i32_65 = arith.constant 0 : i32
      %c0_i32_66 = arith.constant 0 : i32
      %c3_i32_67 = arith.constant 3 : i32
      %c0_i32_68 = arith.constant 0 : i32
      %80 = tpu.memref_slice %arg2[%79, %c0_i32_68] : memref<32x128xf32, #tpu.memory_space<any>> -> memref<1x128xf32, #tpu.memory_space<any>>
      %c3_i32_69 = arith.constant 3 : i32
      %c0_i32_70 = arith.constant 0 : i32
      %81 = tpu.memref_slice %arg4[%c0_i32_65, %c3_i32_69, %c0_i32_70] : memref<2x8x128xf32, #tpu.memory_space<vmem>> -> memref<1x1x128xf32, #tpu.memory_space<vmem>>
      %82 = tpu.memref_squeeze %81 : memref<1x1x128xf32, #tpu.memory_space<vmem>> -> memref<1x128xf32, #tpu.memory_space<vmem>>
      %83 = tpu.memref_slice %arg5[%c0_i32_66, %c3_i32_67] : memref<2x8x!tpu.dma_semaphore, #tpu.memory_space<semaphore_mem>> -> memref<1x1x!tpu.dma_semaphore, #tpu.memory_space<semaphore_mem>>
      %84 = tpu.memref_squeeze %83 : memref<1x1x!tpu.dma_semaphore, #tpu.memory_space<semaphore_mem>> -> memref<!tpu.dma_semaphore, #tpu.memory_space<semaphore_mem>>
      tpu.enqueue_dma source(%80 : memref<1x128xf32, #tpu.memory_space<any>>) target(%82 : memref<1x128xf32, #tpu.memory_space<vmem>>) target_semaphore(%84 : memref<!tpu.dma_semaphore, #tpu.memory_space<semaphore_mem>>)
      %c4 = arith.constant 4 : index
      %85 = memref.load %arg1[%c4] : memref<16xi32, #tpu.memory_space<smem>>
      %c0_i32_71 = arith.constant 0 : i32
      %c0_i32_72 = arith.constant 0 : i32
      %c4_i32_73 = arith.constant 4 : i32
      %c0_i32_74 = arith.constant 0 : i32
      %86 = tpu.memref_slice %arg2[%85, %c0_i32_74] : memref<32x128xf32, #tpu.memory_space<any>> -> memref<1x128xf32, #tpu.memory_space<any>>
      %c4_i32_75 = arith.constant 4 : i32
      %c0_i32_76 = arith.constant 0 : i32
      %87 = tpu.memref_slice %arg4[%c0_i32_71, %c4_i32_75, %c0_i32_76] : memref<2x8x128xf32, #tpu.memory_space<vmem>> -> memref<1x1x128xf32, #tpu.memory_space<vmem>>
      %88 = tpu.memref_squeeze %87 : memref<1x1x128xf32, #tpu.memory_space<vmem>> -> memref<1x128xf32, #tpu.memory_space<vmem>>
      %89 = tpu.memref_slice %arg5[%c0_i32_72, %c4_i32_73] : memref<2x8x!tpu.dma_semaphore, #tpu.memory_space<semaphore_mem>> -> memref<1x1x!tpu.dma_semaphore, #tpu.memory_space<semaphore_mem>>
      %90 = tpu.memref_squeeze %89 : memref<1x1x!tpu.dma_semaphore, #tpu.memory_space<semaphore_mem>> -> memref<!tpu.dma_semaphore, #tpu.memory_space<semaphore_mem>>
      tpu.enqueue_dma source(%86 : memref<1x128xf32, #tpu.memory_space<any>>) target(%88 : memref<1x128xf32, #tpu.memory_space<vmem>>) target_semaphore(%90 : memref<!tpu.dma_semaphore, #tpu.memory_space<semaphore_mem>>)
      %c5 = arith.constant 5 : index
      %91 = memref.load %arg1[%c5] : memref<16xi32, #tpu.memory_space<smem>>
      %c0_i32_77 = arith.constant 0 : i32
      %c0_i32_78 = arith.constant 0 : i32
      %c5_i32_79 = arith.constant 5 : i32
      %c0_i32_80 = arith.constant 0 : i32
      %92 = tpu.memref_slice %arg2[%91, %c0_i32_80] : memref<32x128xf32, #tpu.memory_space<any>> -> memref<1x128xf32, #tpu.memory_space<any>>
      %c5_i32_81 = arith.constant 5 : i32
      %c0_i32_82 = arith.constant 0 : i32
      %93 = tpu.memref_slice %arg4[%c0_i32_77, %c5_i32_81, %c0_i32_82] : memref<2x8x128xf32, #tpu.memory_space<vmem>> -> memref<1x1x128xf32, #tpu.memory_space<vmem>>
      %94 = tpu.memref_squeeze %93 : memref<1x1x128xf32, #tpu.memory_space<vmem>> -> memref<1x128xf32, #tpu.memory_space<vmem>>
      %95 = tpu.memref_slice %arg5[%c0_i32_78, %c5_i32_79] : memref<2x8x!tpu.dma_semaphore, #tpu.memory_space<semaphore_mem>> -> memref<1x1x!tpu.dma_semaphore, #tpu.memory_space<semaphore_mem>>
      %96 = tpu.memref_squeeze %95 : memref<1x1x!tpu.dma_semaphore, #tpu.memory_space<semaphore_mem>> -> memref<!tpu.dma_semaphore, #tpu.memory_space<semaphore_mem>>
      tpu.enqueue_dma source(%92 : memref<1x128xf32, #tpu.memory_space<any>>) target(%94 : memref<1x128xf32, #tpu.memory_space<vmem>>) target_semaphore(%96 : memref<!tpu.dma_semaphore, #tpu.memory_space<semaphore_mem>>)
      %c6 = arith.constant 6 : index
      %97 = memref.load %arg1[%c6] : memref<16xi32, #tpu.memory_space<smem>>
      %c0_i32_83 = arith.constant 0 : i32
      %c0_i32_84 = arith.constant 0 : i32
      %c6_i32_85 = arith.constant 6 : i32
      %c0_i32_86 = arith.constant 0 : i32
      %98 = tpu.memref_slice %arg2[%97, %c0_i32_86] : memref<32x128xf32, #tpu.memory_space<any>> -> memref<1x128xf32, #tpu.memory_space<any>>
      %c6_i32_87 = arith.constant 6 : i32
      %c0_i32_88 = arith.constant 0 : i32
      %99 = tpu.memref_slice %arg4[%c0_i32_83, %c6_i32_87, %c0_i32_88] : memref<2x8x128xf32, #tpu.memory_space<vmem>> -> memref<1x1x128xf32, #tpu.memory_space<vmem>>
      %100 = tpu.memref_squeeze %99 : memref<1x1x128xf32, #tpu.memory_space<vmem>> -> memref<1x128xf32, #tpu.memory_space<vmem>>
      %101 = tpu.memref_slice %arg5[%c0_i32_84, %c6_i32_85] : memref<2x8x!tpu.dma_semaphore, #tpu.memory_space<semaphore_mem>> -> memref<1x1x!tpu.dma_semaphore, #tpu.memory_space<semaphore_mem>>
      %102 = tpu.memref_squeeze %101 : memref<1x1x!tpu.dma_semaphore, #tpu.memory_space<semaphore_mem>> -> memref<!tpu.dma_semaphore, #tpu.memory_space<semaphore_mem>>
      tpu.enqueue_dma source(%98 : memref<1x128xf32, #tpu.memory_space<any>>) target(%100 : memref<1x128xf32, #tpu.memory_space<vmem>>) target_semaphore(%102 : memref<!tpu.dma_semaphore, #tpu.memory_space<semaphore_mem>>)
      %c7 = arith.constant 7 : index
      %103 = memref.load %arg1[%c7] : memref<16xi32, #tpu.memory_space<smem>>
      %c0_i32_89 = arith.constant 0 : i32
      %c0_i32_90 = arith.constant 0 : i32
      %c7_i32_91 = arith.constant 7 : i32
      %c0_i32_92 = arith.constant 0 : i32
      %104 = tpu.memref_slice %arg2[%103, %c0_i32_92] : memref<32x128xf32, #tpu.memory_space<any>> -> memref<1x128xf32, #tpu.memory_space<any>>
      %c7_i32_93 = arith.constant 7 : i32
      %c0_i32_94 = arith.constant 0 : i32
      %105 = tpu.memref_slice %arg4[%c0_i32_89, %c7_i32_93, %c0_i32_94] : memref<2x8x128xf32, #tpu.memory_space<vmem>> -> memref<1x1x128xf32, #tpu.memory_space<vmem>>
      %106 = tpu.memref_squeeze %105 : memref<1x1x128xf32, #tpu.memory_space<vmem>> -> memref<1x128xf32, #tpu.memory_space<vmem>>
      %107 = tpu.memref_slice %arg5[%c0_i32_90, %c7_i32_91] : memref<2x8x!tpu.dma_semaphore, #tpu.memory_space<semaphore_mem>> -> memref<1x1x!tpu.dma_semaphore, #tpu.memory_space<semaphore_mem>>
      %108 = tpu.memref_squeeze %107 : memref<1x1x!tpu.dma_semaphore, #tpu.memory_space<semaphore_mem>> -> memref<!tpu.dma_semaphore, #tpu.memory_space<semaphore_mem>>
      tpu.enqueue_dma source(%104 : memref<1x128xf32, #tpu.memory_space<any>>) target(%106 : memref<1x128xf32, #tpu.memory_space<vmem>>) target_semaphore(%108 : memref<!tpu.dma_semaphore, #tpu.memory_space<semaphore_mem>>)
    } else {
    }
    %c1_i32_5 = arith.constant 1 : i32
    %13 = arith.addi %arg0, %c1_i32_5 : i32
    %c2_i32_6 = arith.constant 2 : i32
    %14 = arith.cmpi slt, %13, %c2_i32_6 : i32
    %15 = arith.extui %14 : i1 to i32
    %c0_i32_7 = arith.constant 0 : i32
    %16 = arith.cmpi ne, %15, %c0_i32_7 : i32
    scf.if %16 {
      %c1_i32_46 = arith.constant 1 : i32
      %61 = arith.addi %arg0, %c1_i32_46 : i32
      %c1_i32_47 = arith.constant 1 : i32
      %62 = arith.subi %c1_i32_47, %9 : i32
      %c8_i32 = arith.constant 8 : i32
      %63 = arith.muli %61, %c8_i32 : i32
      %c0_i32_48 = arith.constant 0 : i32
      %64 = arith.addi %63, %c0_i32_48 : i32
      %65 = arith.index_cast %64 : i32 to index
      %66 = memref.load %arg1[%65] : memref<16xi32, #tpu.memory_space<smem>>
      %c0_i32_49 = arith.constant 0 : i32
      %c0_i32_50 = arith.constant 0 : i32
      %67 = tpu.memref_slice %arg2[%66, %c0_i32_50] : memref<32x128xf32, #tpu.memory_space<any>> -> memref<1x128xf32, #tpu.memory_space<any>>
      %c0_i32_51 = arith.constant 0 : i32
      %c0_i32_52 = arith.constant 0 : i32
      %68 = tpu.memref_slice %arg4[%62, %c0_i32_51, %c0_i32_52] : memref<2x8x128xf32, #tpu.memory_space<vmem>> -> memref<1x1x128xf32, #tpu.memory_space<vmem>>
      %69 = tpu.memref_squeeze %68 : memref<1x1x128xf32, #tpu.memory_space<vmem>> -> memref<1x128xf32, #tpu.memory_space<vmem>>
      %70 = tpu.memref_slice %arg5[%62, %c0_i32_49] : memref<2x8x!tpu.dma_semaphore, #tpu.memory_space<semaphore_mem>> -> memref<1x1x!tpu.dma_semaphore, #tpu.memory_space<semaphore_mem>>
      %71 = tpu.memref_squeeze %70 : memref<1x1x!tpu.dma_semaphore, #tpu.memory_space<semaphore_mem>> -> memref<!tpu.dma_semaphore, #tpu.memory_space<semaphore_mem>>
      tpu.enqueue_dma source(%67 : memref<1x128xf32, #tpu.memory_space<any>>) target(%69 : memref<1x128xf32, #tpu.memory_space<vmem>>) target_semaphore(%71 : memref<!tpu.dma_semaphore, #tpu.memory_space<semaphore_mem>>)
      %c1_i32_53 = arith.constant 1 : i32
      %72 = arith.addi %63, %c1_i32_53 : i32
      %73 = arith.index_cast %72 : i32 to index
      %74 = memref.load %arg1[%73] : memref<16xi32, #tpu.memory_space<smem>>
      %c1_i32_54 = arith.constant 1 : i32
      %c0_i32_55 = arith.constant 0 : i32
      %75 = tpu.memref_slice %arg2[%74, %c0_i32_55] : memref<32x128xf32, #tpu.memory_space<any>> -> memref<1x128xf32, #tpu.memory_space<any>>
      %c1_i32_56 = arith.constant 1 : i32
      %c0_i32_57 = arith.constant 0 : i32
      %76 = tpu.memref_slice %arg4[%62, %c1_i32_56, %c0_i32_57] : memref<2x8x128xf32, #tpu.memory_space<vmem>> -> memref<1x1x128xf32, #tpu.memory_space<vmem>>
      %77 = tpu.memref_squeeze %76 : memref<1x1x128xf32, #tpu.memory_space<vmem>> -> memref<1x128xf32, #tpu.memory_space<vmem>>
      %78 = tpu.memref_slice %arg5[%62, %c1_i32_54] : memref<2x8x!tpu.dma_semaphore, #tpu.memory_space<semaphore_mem>> -> memref<1x1x!tpu.dma_semaphore, #tpu.memory_space<semaphore_mem>>
      %79 = tpu.memref_squeeze %78 : memref<1x1x!tpu.dma_semaphore, #tpu.memory_space<semaphore_mem>> -> memref<!tpu.dma_semaphore, #tpu.memory_space<semaphore_mem>>
      tpu.enqueue_dma source(%75 : memref<1x128xf32, #tpu.memory_space<any>>) target(%77 : memref<1x128xf32, #tpu.memory_space<vmem>>) target_semaphore(%79 : memref<!tpu.dma_semaphore, #tpu.memory_space<semaphore_mem>>)
      %c2_i32_58 = arith.constant 2 : i32
      %80 = arith.addi %63, %c2_i32_58 : i32
      %81 = arith.index_cast %80 : i32 to index
      %82 = memref.load %arg1[%81] : memref<16xi32, #tpu.memory_space<smem>>
      %c2_i32_59 = arith.constant 2 : i32
      %c0_i32_60 = arith.constant 0 : i32
      %83 = tpu.memref_slice %arg2[%82, %c0_i32_60] : memref<32x128xf32, #tpu.memory_space<any>> -> memref<1x128xf32, #tpu.memory_space<any>>
      %c2_i32_61 = arith.constant 2 : i32
      %c0_i32_62 = arith.constant 0 : i32
      %84 = tpu.memref_slice %arg4[%62, %c2_i32_61, %c0_i32_62] : memref<2x8x128xf32, #tpu.memory_space<vmem>> -> memref<1x1x128xf32, #tpu.memory_space<vmem>>
      %85 = tpu.memref_squeeze %84 : memref<1x1x128xf32, #tpu.memory_space<vmem>> -> memref<1x128xf32, #tpu.memory_space<vmem>>
      %86 = tpu.memref_slice %arg5[%62, %c2_i32_59] : memref<2x8x!tpu.dma_semaphore, #tpu.memory_space<semaphore_mem>> -> memref<1x1x!tpu.dma_semaphore, #tpu.memory_space<semaphore_mem>>
      %87 = tpu.memref_squeeze %86 : memref<1x1x!tpu.dma_semaphore, #tpu.memory_space<semaphore_mem>> -> memref<!tpu.dma_semaphore, #tpu.memory_space<semaphore_mem>>
      tpu.enqueue_dma source(%83 : memref<1x128xf32, #tpu.memory_space<any>>) target(%85 : memref<1x128xf32, #tpu.memory_space<vmem>>) target_semaphore(%87 : memref<!tpu.dma_semaphore, #tpu.memory_space<semaphore_mem>>)
      %c3_i32_63 = arith.constant 3 : i32
      %88 = arith.addi %63, %c3_i32_63 : i32
      %89 = arith.index_cast %88 : i32 to index
      %90 = memref.load %arg1[%89] : memref<16xi32, #tpu.memory_space<smem>>
      %c3_i32_64 = arith.constant 3 : i32
      %c0_i32_65 = arith.constant 0 : i32
      %91 = tpu.memref_slice %arg2[%90, %c0_i32_65] : memref<32x128xf32, #tpu.memory_space<any>> -> memref<1x128xf32, #tpu.memory_space<any>>
      %c3_i32_66 = arith.constant 3 : i32
      %c0_i32_67 = arith.constant 0 : i32
      %92 = tpu.memref_slice %arg4[%62, %c3_i32_66, %c0_i32_67] : memref<2x8x128xf32, #tpu.memory_space<vmem>> -> memref<1x1x128xf32, #tpu.memory_space<vmem>>
      %93 = tpu.memref_squeeze %92 : memref<1x1x128xf32, #tpu.memory_space<vmem>> -> memref<1x128xf32, #tpu.memory_space<vmem>>
      %94 = tpu.memref_slice %arg5[%62, %c3_i32_64] : memref<2x8x!tpu.dma_semaphore, #tpu.memory_space<semaphore_mem>> -> memref<1x1x!tpu.dma_semaphore, #tpu.memory_space<semaphore_mem>>
      %95 = tpu.memref_squeeze %94 : memref<1x1x!tpu.dma_semaphore, #tpu.memory_space<semaphore_mem>> -> memref<!tpu.dma_semaphore, #tpu.memory_space<semaphore_mem>>
      tpu.enqueue_dma source(%91 : memref<1x128xf32, #tpu.memory_space<any>>) target(%93 : memref<1x128xf32, #tpu.memory_space<vmem>>) target_semaphore(%95 : memref<!tpu.dma_semaphore, #tpu.memory_space<semaphore_mem>>)
      %c4_i32_68 = arith.constant 4 : i32
      %96 = arith.addi %63, %c4_i32_68 : i32
      %97 = arith.index_cast %96 : i32 to index
      %98 = memref.load %arg1[%97] : memref<16xi32, #tpu.memory_space<smem>>
      %c4_i32_69 = arith.constant 4 : i32
      %c0_i32_70 = arith.constant 0 : i32
      %99 = tpu.memref_slice %arg2[%98, %c0_i32_70] : memref<32x128xf32, #tpu.memory_space<any>> -> memref<1x128xf32, #tpu.memory_space<any>>
      %c4_i32_71 = arith.constant 4 : i32
      %c0_i32_72 = arith.constant 0 : i32
      %100 = tpu.memref_slice %arg4[%62, %c4_i32_71, %c0_i32_72] : memref<2x8x128xf32, #tpu.memory_space<vmem>> -> memref<1x1x128xf32, #tpu.memory_space<vmem>>
      %101 = tpu.memref_squeeze %100 : memref<1x1x128xf32, #tpu.memory_space<vmem>> -> memref<1x128xf32, #tpu.memory_space<vmem>>
      %102 = tpu.memref_slice %arg5[%62, %c4_i32_69] : memref<2x8x!tpu.dma_semaphore, #tpu.memory_space<semaphore_mem>> -> memref<1x1x!tpu.dma_semaphore, #tpu.memory_space<semaphore_mem>>
      %103 = tpu.memref_squeeze %102 : memref<1x1x!tpu.dma_semaphore, #tpu.memory_space<semaphore_mem>> -> memref<!tpu.dma_semaphore, #tpu.memory_space<semaphore_mem>>
      tpu.enqueue_dma source(%99 : memref<1x128xf32, #tpu.memory_space<any>>) target(%101 : memref<1x128xf32, #tpu.memory_space<vmem>>) target_semaphore(%103 : memref<!tpu.dma_semaphore, #tpu.memory_space<semaphore_mem>>)
      %c5_i32_73 = arith.constant 5 : i32
      %104 = arith.addi %63, %c5_i32_73 : i32
      %105 = arith.index_cast %104 : i32 to index
      %106 = memref.load %arg1[%105] : memref<16xi32, #tpu.memory_space<smem>>
      %c5_i32_74 = arith.constant 5 : i32
      %c0_i32_75 = arith.constant 0 : i32
      %107 = tpu.memref_slice %arg2[%106, %c0_i32_75] : memref<32x128xf32, #tpu.memory_space<any>> -> memref<1x128xf32, #tpu.memory_space<any>>
      %c5_i32_76 = arith.constant 5 : i32
      %c0_i32_77 = arith.constant 0 : i32
      %108 = tpu.memref_slice %arg4[%62, %c5_i32_76, %c0_i32_77] : memref<2x8x128xf32, #tpu.memory_space<vmem>> -> memref<1x1x128xf32, #tpu.memory_space<vmem>>
      %109 = tpu.memref_squeeze %108 : memref<1x1x128xf32, #tpu.memory_space<vmem>> -> memref<1x128xf32, #tpu.memory_space<vmem>>
      %110 = tpu.memref_slice %arg5[%62, %c5_i32_74] : memref<2x8x!tpu.dma_semaphore, #tpu.memory_space<semaphore_mem>> -> memref<1x1x!tpu.dma_semaphore, #tpu.memory_space<semaphore_mem>>
      %111 = tpu.memref_squeeze %110 : memref<1x1x!tpu.dma_semaphore, #tpu.memory_space<semaphore_mem>> -> memref<!tpu.dma_semaphore, #tpu.memory_space<semaphore_mem>>
      tpu.enqueue_dma source(%107 : memref<1x128xf32, #tpu.memory_space<any>>) target(%109 : memref<1x128xf32, #tpu.memory_space<vmem>>) target_semaphore(%111 : memref<!tpu.dma_semaphore, #tpu.memory_space<semaphore_mem>>)
      %c6_i32_78 = arith.constant 6 : i32
      %112 = arith.addi %63, %c6_i32_78 : i32
      %113 = arith.index_cast %112 : i32 to index
      %114 = memref.load %arg1[%113] : memref<16xi32, #tpu.memory_space<smem>>
      %c6_i32_79 = arith.constant 6 : i32
      %c0_i32_80 = arith.constant 0 : i32
      %115 = tpu.memref_slice %arg2[%114, %c0_i32_80] : memref<32x128xf32, #tpu.memory_space<any>> -> memref<1x128xf32, #tpu.memory_space<any>>
      %c6_i32_81 = arith.constant 6 : i32
      %c0_i32_82 = arith.constant 0 : i32
      %116 = tpu.memref_slice %arg4[%62, %c6_i32_81, %c0_i32_82] : memref<2x8x128xf32, #tpu.memory_space<vmem>> -> memref<1x1x128xf32, #tpu.memory_space<vmem>>
      %117 = tpu.memref_squeeze %116 : memref<1x1x128xf32, #tpu.memory_space<vmem>> -> memref<1x128xf32, #tpu.memory_space<vmem>>
      %118 = tpu.memref_slice %arg5[%62, %c6_i32_79] : memref<2x8x!tpu.dma_semaphore, #tpu.memory_space<semaphore_mem>> -> memref<1x1x!tpu.dma_semaphore, #tpu.memory_space<semaphore_mem>>
      %119 = tpu.memref_squeeze %118 : memref<1x1x!tpu.dma_semaphore, #tpu.memory_space<semaphore_mem>> -> memref<!tpu.dma_semaphore, #tpu.memory_space<semaphore_mem>>
      tpu.enqueue_dma source(%115 : memref<1x128xf32, #tpu.memory_space<any>>) target(%117 : memref<1x128xf32, #tpu.memory_space<vmem>>) target_semaphore(%119 : memref<!tpu.dma_semaphore, #tpu.memory_space<semaphore_mem>>)
      %c7_i32_83 = arith.constant 7 : i32
      %120 = arith.addi %63, %c7_i32_83 : i32
      %121 = arith.index_cast %120 : i32 to index
      %122 = memref.load %arg1[%121] : memref<16xi32, #tpu.memory_space<smem>>
      %c7_i32_84 = arith.constant 7 : i32
      %c0_i32_85 = arith.constant 0 : i32
      %123 = tpu.memref_slice %arg2[%122, %c0_i32_85] : memref<32x128xf32, #tpu.memory_space<any>> -> memref<1x128xf32, #tpu.memory_space<any>>
      %c7_i32_86 = arith.constant 7 : i32
      %c0_i32_87 = arith.constant 0 : i32
      %124 = tpu.memref_slice %arg4[%62, %c7_i32_86, %c0_i32_87] : memref<2x8x128xf32, #tpu.memory_space<vmem>> -> memref<1x1x128xf32, #tpu.memory_space<vmem>>
      %125 = tpu.memref_squeeze %124 : memref<1x1x128xf32, #tpu.memory_space<vmem>> -> memref<1x128xf32, #tpu.memory_space<vmem>>
      %126 = tpu.memref_slice %arg5[%62, %c7_i32_84] : memref<2x8x!tpu.dma_semaphore, #tpu.memory_space<semaphore_mem>> -> memref<1x1x!tpu.dma_semaphore, #tpu.memory_space<semaphore_mem>>
      %127 = tpu.memref_squeeze %126 : memref<1x1x!tpu.dma_semaphore, #tpu.memory_space<semaphore_mem>> -> memref<!tpu.dma_semaphore, #tpu.memory_space<semaphore_mem>>
      tpu.enqueue_dma source(%123 : memref<1x128xf32, #tpu.memory_space<any>>) target(%125 : memref<1x128xf32, #tpu.memory_space<vmem>>) target_semaphore(%127 : memref<!tpu.dma_semaphore, #tpu.memory_space<semaphore_mem>>)
    } else {
    }
    %c0_i32_8 = arith.constant 0 : i32
    %c0_i32_9 = arith.constant 0 : i32
    %c0_i32_10 = arith.constant 0 : i32
    %17 = tpu.memref_slice %arg2[%c0_i32_9, %c0_i32_10] : memref<32x128xf32, #tpu.memory_space<any>> -> memref<1x128xf32, #tpu.memory_space<any>>
    %c0_i32_11 = arith.constant 0 : i32
    %c0_i32_12 = arith.constant 0 : i32
    %18 = tpu.memref_slice %arg4[%9, %c0_i32_11, %c0_i32_12] : memref<2x8x128xf32, #tpu.memory_space<vmem>> -> memref<1x1x128xf32, #tpu.memory_space<vmem>>
    %19 = tpu.memref_squeeze %18 : memref<1x1x128xf32, #tpu.memory_space<vmem>> -> memref<1x128xf32, #tpu.memory_space<vmem>>
    %20 = tpu.memref_slice %arg5[%9, %c0_i32_8] : memref<2x8x!tpu.dma_semaphore, #tpu.memory_space<semaphore_mem>> -> memref<1x1x!tpu.dma_semaphore, #tpu.memory_space<semaphore_mem>>
    %21 = tpu.memref_squeeze %20 : memref<1x1x!tpu.dma_semaphore, #tpu.memory_space<semaphore_mem>> -> memref<!tpu.dma_semaphore, #tpu.memory_space<semaphore_mem>>
    tpu.wait_dma2 semaphore(%21 : memref<!tpu.dma_semaphore, #tpu.memory_space<semaphore_mem>>) src(%17 : memref<1x128xf32, #tpu.memory_space<any>>) dst(%19 : memref<1x128xf32, #tpu.memory_space<vmem>>)
    %c1_i32_13 = arith.constant 1 : i32
    %c0_i32_14 = arith.constant 0 : i32
    %c0_i32_15 = arith.constant 0 : i32
    %22 = tpu.memref_slice %arg2[%c0_i32_14, %c0_i32_15] : memref<32x128xf32, #tpu.memory_space<any>> -> memref<1x128xf32, #tpu.memory_space<any>>
    %c1_i32_16 = arith.constant 1 : i32
    %c0_i32_17 = arith.constant 0 : i32
    %23 = tpu.memref_slice %arg4[%9, %c1_i32_16, %c0_i32_17] : memref<2x8x128xf32, #tpu.memory_space<vmem>> -> memref<1x1x128xf32, #tpu.memory_space<vmem>>
    %24 = tpu.memref_squeeze %23 : memref<1x1x128xf32, #tpu.memory_space<vmem>> -> memref<1x128xf32, #tpu.memory_space<vmem>>
    %25 = tpu.memref_slice %arg5[%9, %c1_i32_13] : memref<2x8x!tpu.dma_semaphore, #tpu.memory_space<semaphore_mem>> -> memref<1x1x!tpu.dma_semaphore, #tpu.memory_space<semaphore_mem>>
    %26 = tpu.memref_squeeze %25 : memref<1x1x!tpu.dma_semaphore, #tpu.memory_space<semaphore_mem>> -> memref<!tpu.dma_semaphore, #tpu.memory_space<semaphore_mem>>
    tpu.wait_dma2 semaphore(%26 : memref<!tpu.dma_semaphore, #tpu.memory_space<semaphore_mem>>) src(%22 : memref<1x128xf32, #tpu.memory_space<any>>) dst(%24 : memref<1x128xf32, #tpu.memory_space<vmem>>)
    %c2_i32_18 = arith.constant 2 : i32
    %c0_i32_19 = arith.constant 0 : i32
    %c0_i32_20 = arith.constant 0 : i32
    %27 = tpu.memref_slice %arg2[%c0_i32_19, %c0_i32_20] : memref<32x128xf32, #tpu.memory_space<any>> -> memref<1x128xf32, #tpu.memory_space<any>>
    %c2_i32_21 = arith.constant 2 : i32
    %c0_i32_22 = arith.constant 0 : i32
    %28 = tpu.memref_slice %arg4[%9, %c2_i32_21, %c0_i32_22] : memref<2x8x128xf32, #tpu.memory_space<vmem>> -> memref<1x1x128xf32, #tpu.memory_space<vmem>>
    %29 = tpu.memref_squeeze %28 : memref<1x1x128xf32, #tpu.memory_space<vmem>> -> memref<1x128xf32, #tpu.memory_space<vmem>>
    %30 = tpu.memref_slice %arg5[%9, %c2_i32_18] : memref<2x8x!tpu.dma_semaphore, #tpu.memory_space<semaphore_mem>> -> memref<1x1x!tpu.dma_semaphore, #tpu.memory_space<semaphore_mem>>
    %31 = tpu.memref_squeeze %30 : memref<1x1x!tpu.dma_semaphore, #tpu.memory_space<semaphore_mem>> -> memref<!tpu.dma_semaphore, #tpu.memory_space<semaphore_mem>>
    tpu.wait_dma2 semaphore(%31 : memref<!tpu.dma_semaphore, #tpu.memory_space<semaphore_mem>>) src(%27 : memref<1x128xf32, #tpu.memory_space<any>>) dst(%29 : memref<1x128xf32, #tpu.memory_space<vmem>>)
    %c3_i32 = arith.constant 3 : i32
    %c0_i32_23 = arith.constant 0 : i32
    %c0_i32_24 = arith.constant 0 : i32
    %32 = tpu.memref_slice %arg2[%c0_i32_23, %c0_i32_24] : memref<32x128xf32, #tpu.memory_space<any>> -> memref<1x128xf32, #tpu.memory_space<any>>
    %c3_i32_25 = arith.constant 3 : i32
    %c0_i32_26 = arith.constant 0 : i32
    %33 = tpu.memref_slice %arg4[%9, %c3_i32_25, %c0_i32_26] : memref<2x8x128xf32, #tpu.memory_space<vmem>> -> memref<1x1x128xf32, #tpu.memory_space<vmem>>
    %34 = tpu.memref_squeeze %33 : memref<1x1x128xf32, #tpu.memory_space<vmem>> -> memref<1x128xf32, #tpu.memory_space<vmem>>
    %35 = tpu.memref_slice %arg5[%9, %c3_i32] : memref<2x8x!tpu.dma_semaphore, #tpu.memory_space<semaphore_mem>> -> memref<1x1x!tpu.dma_semaphore, #tpu.memory_space<semaphore_mem>>
    %36 = tpu.memref_squeeze %35 : memref<1x1x!tpu.dma_semaphore, #tpu.memory_space<semaphore_mem>> -> memref<!tpu.dma_semaphore, #tpu.memory_space<semaphore_mem>>
    tpu.wait_dma2 semaphore(%36 : memref<!tpu.dma_semaphore, #tpu.memory_space<semaphore_mem>>) src(%32 : memref<1x128xf32, #tpu.memory_space<any>>) dst(%34 : memref<1x128xf32, #tpu.memory_space<vmem>>)
    %c4_i32 = arith.constant 4 : i32
    %c0_i32_27 = arith.constant 0 : i32
    %c0_i32_28 = arith.constant 0 : i32
    %37 = tpu.memref_slice %arg2[%c0_i32_27, %c0_i32_28] : memref<32x128xf32, #tpu.memory_space<any>> -> memref<1x128xf32, #tpu.memory_space<any>>
    %c4_i32_29 = arith.constant 4 : i32
    %c0_i32_30 = arith.constant 0 : i32
    %38 = tpu.memref_slice %arg4[%9, %c4_i32_29, %c0_i32_30] : memref<2x8x128xf32, #tpu.memory_space<vmem>> -> memref<1x1x128xf32, #tpu.memory_space<vmem>>
    %39 = tpu.memref_squeeze %38 : memref<1x1x128xf32, #tpu.memory_space<vmem>> -> memref<1x128xf32, #tpu.memory_space<vmem>>
    %40 = tpu.memref_slice %arg5[%9, %c4_i32] : memref<2x8x!tpu.dma_semaphore, #tpu.memory_space<semaphore_mem>> -> memref<1x1x!tpu.dma_semaphore, #tpu.memory_space<semaphore_mem>>
    %41 = tpu.memref_squeeze %40 : memref<1x1x!tpu.dma_semaphore, #tpu.memory_space<semaphore_mem>> -> memref<!tpu.dma_semaphore, #tpu.memory_space<semaphore_mem>>
    tpu.wait_dma2 semaphore(%41 : memref<!tpu.dma_semaphore, #tpu.memory_space<semaphore_mem>>) src(%37 : memref<1x128xf32, #tpu.memory_space<any>>) dst(%39 : memref<1x128xf32, #tpu.memory_space<vmem>>)
    %c5_i32 = arith.constant 5 : i32
    %c0_i32_31 = arith.constant 0 : i32
    %c0_i32_32 = arith.constant 0 : i32
    %42 = tpu.memref_slice %arg2[%c0_i32_31, %c0_i32_32] : memref<32x128xf32, #tpu.memory_space<any>> -> memref<1x128xf32, #tpu.memory_space<any>>
    %c5_i32_33 = arith.constant 5 : i32
    %c0_i32_34 = arith.constant 0 : i32
    %43 = tpu.memref_slice %arg4[%9, %c5_i32_33, %c0_i32_34] : memref<2x8x128xf32, #tpu.memory_space<vmem>> -> memref<1x1x128xf32, #tpu.memory_space<vmem>>
    %44 = tpu.memref_squeeze %43 : memref<1x1x128xf32, #tpu.memory_space<vmem>> -> memref<1x128xf32, #tpu.memory_space<vmem>>
    %45 = tpu.memref_slice %arg5[%9, %c5_i32] : memref<2x8x!tpu.dma_semaphore, #tpu.memory_space<semaphore_mem>> -> memref<1x1x!tpu.dma_semaphore, #tpu.memory_space<semaphore_mem>>
    %46 = tpu.memref_squeeze %45 : memref<1x1x!tpu.dma_semaphore, #tpu.memory_space<semaphore_mem>> -> memref<!tpu.dma_semaphore, #tpu.memory_space<semaphore_mem>>
    tpu.wait_dma2 semaphore(%46 : memref<!tpu.dma_semaphore, #tpu.memory_space<semaphore_mem>>) src(%42 : memref<1x128xf32, #tpu.memory_space<any>>) dst(%44 : memref<1x128xf32, #tpu.memory_space<vmem>>)
    %c6_i32 = arith.constant 6 : i32
    %c0_i32_35 = arith.constant 0 : i32
    %c0_i32_36 = arith.constant 0 : i32
    %47 = tpu.memref_slice %arg2[%c0_i32_35, %c0_i32_36] : memref<32x128xf32, #tpu.memory_space<any>> -> memref<1x128xf32, #tpu.memory_space<any>>
    %c6_i32_37 = arith.constant 6 : i32
    %c0_i32_38 = arith.constant 0 : i32
    %48 = tpu.memref_slice %arg4[%9, %c6_i32_37, %c0_i32_38] : memref<2x8x128xf32, #tpu.memory_space<vmem>> -> memref<1x1x128xf32, #tpu.memory_space<vmem>>
    %49 = tpu.memref_squeeze %48 : memref<1x1x128xf32, #tpu.memory_space<vmem>> -> memref<1x128xf32, #tpu.memory_space<vmem>>
    %50 = tpu.memref_slice %arg5[%9, %c6_i32] : memref<2x8x!tpu.dma_semaphore, #tpu.memory_space<semaphore_mem>> -> memref<1x1x!tpu.dma_semaphore, #tpu.memory_space<semaphore_mem>>
    %51 = tpu.memref_squeeze %50 : memref<1x1x!tpu.dma_semaphore, #tpu.memory_space<semaphore_mem>> -> memref<!tpu.dma_semaphore, #tpu.memory_space<semaphore_mem>>
    tpu.wait_dma2 semaphore(%51 : memref<!tpu.dma_semaphore, #tpu.memory_space<semaphore_mem>>) src(%47 : memref<1x128xf32, #tpu.memory_space<any>>) dst(%49 : memref<1x128xf32, #tpu.memory_space<vmem>>)
    %c7_i32 = arith.constant 7 : i32
    %c0_i32_39 = arith.constant 0 : i32
    %c0_i32_40 = arith.constant 0 : i32
    %52 = tpu.memref_slice %arg2[%c0_i32_39, %c0_i32_40] : memref<32x128xf32, #tpu.memory_space<any>> -> memref<1x128xf32, #tpu.memory_space<any>>
    %c7_i32_41 = arith.constant 7 : i32
    %c0_i32_42 = arith.constant 0 : i32
    %53 = tpu.memref_slice %arg4[%9, %c7_i32_41, %c0_i32_42] : memref<2x8x128xf32, #tpu.memory_space<vmem>> -> memref<1x1x128xf32, #tpu.memory_space<vmem>>
    %54 = tpu.memref_squeeze %53 : memref<1x1x128xf32, #tpu.memory_space<vmem>> -> memref<1x128xf32, #tpu.memory_space<vmem>>
    %55 = tpu.memref_slice %arg5[%9, %c7_i32] : memref<2x8x!tpu.dma_semaphore, #tpu.memory_space<semaphore_mem>> -> memref<1x1x!tpu.dma_semaphore, #tpu.memory_space<semaphore_mem>>
    %56 = tpu.memref_squeeze %55 : memref<1x1x!tpu.dma_semaphore, #tpu.memory_space<semaphore_mem>> -> memref<!tpu.dma_semaphore, #tpu.memory_space<semaphore_mem>>
    tpu.wait_dma2 semaphore(%56 : memref<!tpu.dma_semaphore, #tpu.memory_space<semaphore_mem>>) src(%52 : memref<1x128xf32, #tpu.memory_space<any>>) dst(%54 : memref<1x128xf32, #tpu.memory_space<vmem>>)
    %57 = arith.index_cast %9 : i32 to index
    %c0 = arith.constant 0 : index
    %c0_43 = arith.constant 0 : index
    %58 = vector.load %arg4[%57, %c0, %c0_43] : memref<2x8x128xf32, #tpu.memory_space<vmem>>, vector<1x8x128xf32>
    %59 = vector.shape_cast %58 : vector<1x8x128xf32> to vector<8x128xf32>
    %c0_44 = arith.constant 0 : index
    %c0_45 = arith.constant 0 : index
    %60 = vector.load %arg3[%c0_44, %c0_45] : memref<8x128xf32, #tpu.memory_space<vmem>>, vector<8x128xf32>
    tpu.vector_store %arg3[%c0_44, %c0_45], %59 {strides = array<i32>} : memref<8x128xf32, #tpu.memory_space<vmem>>, vector<8x128xf32>,
    return
  }
  func.func @transform_1(%arg0: i32, %arg1: memref<16xi32, #tpu.memory_space<smem>>) -> (i32, i32) {
    %c0_i32 = arith.constant 0 : i32
    %c0_i32_0 = arith.constant 0 : i32
    return %arg0, %c0_i32 : i32, i32
  }
}

</mosaic_0001>

<llo_original>
// kernel: tpu_custom_call.1
$region0: #{tpu_custom_call.1}
  #allocation0 [shape = 'u32[]', space=smem, size = 0x4, offset = 0x4, fixed_abs, tag = 'smem constant byte address 0x4 - core index']
  #allocation1 [shape = 'u32[72,128]{1,0:T(1,128)}', space=vmem, size = 0x9000, scoped, tag = 'internal scratch']
  #allocation2 [shape = 'f32[2,8,128]{2,1,0:T(8,128)}', space=vmem, size = 0x2000, scoped, tag = 'scratch operand']
  #allocation3 [shape = 's32[16]{0}', space=sflag, size = 0x40, scoped, tag = 'scratch operand']
  #allocation4 [shape = 's32[1]{0}', space=sflag, size = 0x4, scoped, tag = 'scoped memory for tpu_custom_call.1']
  #allocation5 [shape = 'u8[512]{0}', space=smem, size = 0x200, scoped, tag = 'prefetched SMEM operand 0']
  #allocation8 [shape = 's32[]', space=sflag, size = 0x4, offset = 0, fixed_abs, tag = 'sflag constant byte address 0x0 - dummy sync flag']
  #allocation9 [shape = 's32[]', space=sflag, size = 0x4, offset = 0, fixed_abs, tag = 'sflag constant byte address 0x0 - dummy sync flag']
  #allocation10 [shape = 'u32[]', space=smem, size = 0x4, offset = 0x44, fixed_abs, tag = 'smem constant byte address 0x44 - assertion arg 0']
  #allocation11 [shape = 'u32[]', space=smem, size = 0x4, offset = 0x48, fixed_abs, tag = 'smem constant byte address 0x48 - assertion arg 1']
  #allocation12 [shape = 's32[]', space=sflag, size = 0x4, offset = 0, fixed_abs, tag = 'sflag constant byte address 0x0 - dummy sync flag']
  #allocation13 [shape = 's32[]', space=sflag, size = 0x4, offset = 0, fixed_abs, tag = 'sflag constant byte address 0x0 - dummy sync flag']
  #allocation14 [shape = 's32[]', space=sflag, size = 0x4, offset = 0, fixed_abs, tag = 'sflag constant byte address 0x0 - dummy sync flag']
  #allocation15 [shape = 's32[]', space=sflag, size = 0x4, offset = 0, fixed_abs, tag = 'sflag constant byte address 0x0 - dummy sync flag']
  #allocation16 [shape = 's32[]', space=sflag, size = 0x4, offset = 0, fixed_abs, tag = 'sflag constant byte address 0x0 - dummy sync flag']
  #allocation17 [shape = 's32[]', space=sflag, size = 0x4, offset = 0, fixed_abs, tag = 'sflag constant byte address 0x0 - dummy sync flag']
  #allocation18 [shape = 's32[]', space=sflag, size = 0x4, offset = 0, fixed_abs, tag = 'sflag constant byte address 0x0 - dummy sync flag']
  #allocation19 [shape = 's32[]', space=sflag, size = 0x4, offset = 0, fixed_abs, tag = 'sflag constant byte address 0x0 - dummy sync flag']
  #allocation20 [shape = 's32[]', space=sflag, size = 0x4, offset = 0, fixed_abs, tag = 'sflag constant byte address 0x0 - dummy sync flag']
  #allocation21 [shape = 's32[]', space=sflag, size = 0x4, offset = 0, fixed_abs, tag = 'sflag constant byte address 0x0 - dummy sync flag']
  #allocation22 [shape = 's32[]', space=sflag, size = 0x4, offset = 0, fixed_abs, tag = 'sflag constant byte address 0x0 - dummy sync flag']
  #allocation23 [shape = 's32[]', space=sflag, size = 0x4, offset = 0, fixed_abs, tag = 'sflag constant byte address 0x0 - dummy sync flag']
  #allocation24 [shape = 's32[]', space=sflag, size = 0x4, offset = 0, fixed_abs, tag = 'sflag constant byte address 0x0 - dummy sync flag']
  #allocation25 [shape = 's32[]', space=sflag, size = 0x4, offset = 0, fixed_abs, tag = 'sflag constant byte address 0x0 - dummy sync flag']
  #allocation26 [shape = 's32[]', space=sflag, size = 0x4, offset = 0, fixed_abs, tag = 'sflag constant byte address 0x0 - dummy sync flag']
  #allocation27 [shape = 's32[]', space=sflag, size = 0x4, offset = 0, fixed_abs, tag = 'sflag constant byte address 0x0 - dummy sync flag']
  #allocation28 [shape = 's32[]', space=sflag, size = 0x4, offset = 0, fixed_abs, tag = 'sflag constant byte address 0x0 - dummy sync flag']
  #allocation29 [shape = 's32[]', space=sflag, size = 0x4, offset = 0, fixed_abs, tag = 'sflag constant byte address 0x0 - dummy sync flag']
  #allocation30 [shape = 's32[]', space=sflag, size = 0x4, offset = 0, fixed_abs, tag = 'sflag constant byte address 0x0 - dummy sync flag']
  #allocation31 [shape = 's32[]', space=sflag, size = 0x4, offset = 0, fixed_abs, tag = 'sflag constant byte address 0x0 - dummy sync flag']
  #allocation32 [shape = 's32[]', space=sflag, size = 0x4, offset = 0, fixed_abs, tag = 'sflag constant byte address 0x0 - dummy sync flag']
  #allocation33 [shape = 's32[]', space=sflag, size = 0x4, offset = 0, fixed_abs, tag = 'sflag constant byte address 0x0 - dummy sync flag']
  #allocation34 [shape = 's32[]', space=sflag, size = 0x4, offset = 0, fixed_abs, tag = 'sflag constant byte address 0x0 - dummy sync flag']
  #allocation35 [shape = 's32[]', space=sflag, size = 0x4, offset = 0, fixed_abs, tag = 'sflag constant byte address 0x0 - dummy sync flag']
  #allocation36 [shape = 's32[]', space=sflag, size = 0x4, offset = 0, fixed_abs, tag = 'sflag constant byte address 0x0 - dummy sync flag']
  #allocation37 [shape = 's32[]', space=sflag, size = 0x4, offset = 0, fixed_abs, tag = 'sflag constant byte address 0x0 - dummy sync flag']
  #allocation38 [shape = 's32[]', space=sflag, size = 0x4, offset = 0, fixed_abs, tag = 'sflag constant byte address 0x0 - dummy sync flag']
  #allocation39 [shape = 's32[]', space=sflag, size = 0x4, offset = 0, fixed_abs, tag = 'sflag constant byte address 0x0 - dummy sync flag']
  #allocation40 [shape = 's32[]', space=sflag, size = 0x4, offset = 0, fixed_abs, tag = 'sflag constant byte address 0x0 - dummy sync flag']
  #allocation41 [shape = 's32[]', space=sflag, size = 0x4, offset = 0, fixed_abs, tag = 'sflag constant byte address 0x0 - dummy sync flag']
  %s0 = inlined_call_operand.hbm [shape: s32[16], index: 0, kind: input, shape index: {}]
  %s1 = inlined_call_operand.hbm [shape: f32[32,128], index: 1, kind: input, shape index: {}]
  %s2 = inlined_call_operand.hbm [shape: f32[16,128], index: 2, kind: output, shape index: {}]
  %s3 = sld [smem:[#allocation0]]
  $region97: #{tpu_custom_call.1} parent=0
    _
  %s5 = ssub.s32 1, %s3
  %s6 = scalar_select 0, %s5, %s3
  %s8 = sshll.u32 %s0, 4
  %s9 = int_to_ptr.hbm [resolvable:$true] %s8
  %11 = dma.hbm_to_smem %s9, 16, [#allocation5], [#allocation4]
  %13 = dma.done [#allocation4], 16
  %14 = sfence
  $region1: #{tpu_custom_call.1} parent=0
    #allocation6 [shape = 'u8[8192]{0}', space=vmem, size = 0x2000, scoped, tag = 'output window, operand 0']
    #allocation7 [shape = 's32[2]{0}', space=sflag, size = 0x8, scoped, tag = 'scoped memory for tpu_custom_call.1']
    %15 = vsyncpa [#allocation7], 0
    %s16 = scalar_lea.sflag [#allocation7], 1
    %17 = vsyncpa %s16, 0
    loop: start=0, step=1, limit=3
    $region2: #{tpu_custom_call.1} parent=1 // loop_pre_header
      _
    $region3: #{tpu_custom_call.1} parent=1 // loop_header
      %s19 = sphi 0, %s23
      %p20 = scmp.ge.s32.totalorder %s19, 3
      %s28 = sphi 0, %s30
      %s31 = sphi 0, %s28
      %s41 = sphi 0, %s31
    $region4: #{tpu_custom_call.1} parent=1 // loop_header_branch
      %22 = sbr.rel (%p20) target = $region8
    $region5: #{tpu_custom_call.1} parent=1 // loop_body
      %s24 = ssub.s32 %s19, 1
      %s25 = sadd.s32 %s19, 1
      %s26 = ssub.s32 %s19, %s25
      %p27 = scmp.eq.s32.totalorder %s26, 0
      %s29 = sadd.s32 %s28, 1
      %s30 = scalar_select %p27, %s28, %s29
      %p32 = pneg %p27
      %p33 = scmp.eq.s32.totalorder %s19, 1
      %p34 = por %p32, %p33
      %p35 = scmp.ne.s32.totalorder %s28, %s31
      %p36 = scmp.eq.s32.totalorder %s19, 0
      %p37 = por %p35, %p36
      %p38 = scmp.ne.s32.totalorder %s28, %s31
      %p39 = scmp.eq.s32.totalorder %s24, 1
      %p40 = por %p38, %p39
      %p42 = scmp.ne.s32.totalorder %s31, %s41
      %p43 = scmp.eq.s32.totalorder %s24, 0
      %p44 = por %p42, %p43
      %p45 = scmp.lt.s32.totalorder %s19, 2
      // Predicated region
      $region9: #{tpu_custom_call.1} parent=5 // pred_check
        %p46 = pneg %p45
      $region10: #{tpu_custom_call.1} parent=5 // pred_check_branch
        %48 = sbr.rel (%p46) target = $region12
      $region11: #{tpu_custom_call.1} parent=5 // pred_region
        %p49 = pneg %p37
        %p50 = pneg %p34
        %s51 = sand.u32 %s28, 1
        %s52 = scalar_lea.sflag [#allocation7], %s51
        %s53 = sand.u32 %s28, 1
        %s54 = smul.addr %s53, 8
        %s55 = scalar_lea.vmem [#allocation6], %s54
        %p56 = scmp.lt.s32.totalorder %s19, 0
        %s57 = ssub.s32 0, %s19
        %s58 = scalar_select %p56, %s57, %s19
        %s59 = sand.u32 %s58, 1
        %s60 = ssub.s32 0, %s59
        %s61 = scalar_select %p56, %s60, %s59
        %p62 = scmp.ne.s32.totalorder %s61, 0
        %p63 = scmp.lt.s32.totalorder %s61, 0
        %p64 = pnand %p63, %p62
        %p65 = pneg %p64
        %s66 = sadd.s32 %s61, 2
        %s67 = scalar_select %p65, %s66, %s61
        %p68 = scmp.eq.s32.totalorder %s19, 0
        // Predicated region
        $region13: #{tpu_custom_call.1} parent=11 // pred_check
          %p69 = pneg %p68
        $region14: #{tpu_custom_call.1} parent=11 // pred_check_branch
          %71 = sbr.rel (%p69) target = $region16
        $region15: #{tpu_custom_call.1} parent=11 // pred_region
          %s72 = sld [smem:[#allocation5]]
          %s73 = scalar_lea.hbm %s1, %s72
          // Predicated region
          $region17: #{tpu_custom_call.1} parent=15 // pred_check
            _
          $region18: #{tpu_custom_call.1} parent=15 // pred_check_branch
            %75 = sbr.rel target = $region20
          $region19: #{tpu_custom_call.1} parent=15 // pred_region
            %76 = sst [smem:[#allocation10]] [#allocation9]
            %77 = sst [smem:[#allocation11]] [#allocation8]
          $region20: #{tpu_custom_call.1} parent=15 // pred_fallthru
            _
          %79 = shalt.err (0)
          %s81 = sshll.u32 %s73, 4
          %s82 = int_to_ptr.hbm [resolvable:$true] %s81
          %s83 = sshll.u32 [#allocation2], 4
          %s84 = int_to_ptr.vmem [resolvable:$true] %s83
          %86 = dma.hbm_to_vmem [thread:$0]  %s82, 16, %s84, [#allocation3]
          %s87 = sld [smem:[#allocation5 + $0x1]]
          %s88 = scalar_lea.hbm %s1, %s87
          %s89 = scalar_lea.vmem [#allocation2], 1
          %s90 = scalar_lea.sflag [#allocation3], 1
          // Predicated region
          $region21: #{tpu_custom_call.1} parent=15 // pred_check
            _
          $region22: #{tpu_custom_call.1} parent=15 // pred_check_branch
            %92 = sbr.rel target = $region24
          $region23: #{tpu_custom_call.1} parent=15 // pred_region
            %93 = sst [smem:[#allocation10]] [#allocation13]
            %94 = sst [smem:[#allocation11]] [#allocation12]
          $region24: #{tpu_custom_call.1} parent=15 // pred_fallthru
            _
          %96 = shalt.err (0)
          %s98 = sshll.u32 %s88, 4
          %s99 = int_to_ptr.hbm [resolvable:$true] %s98
          %s100 = sshll.u32 %s89, 4
          %s101 = int_to_ptr.vmem [resolvable:$true] %s100
          %103 = dma.hbm_to_vmem [thread:$0]  %s99, 16, %s101, %s90
          %s104 = sld [smem:[#allocation5 + $0x2]]
          %s105 = scalar_lea.hbm %s1, %s104
          %s106 = scalar_lea.vmem [#allocation2], 2
          %s107 = scalar_lea.sflag [#allocation3], 2
          // Predicated region
          $region25: #{tpu_custom_call.1} parent=15 // pred_check
            _
          $region26: #{tpu_custom_call.1} parent=15 // pred_check_branch
            %109 = sbr.rel target = $region28
          $region27: #{tpu_custom_call.1} parent=15 // pred_region
            %110 = sst [smem:[#allocation10]] [#allocation15]
            %111 = sst [smem:[#allocation11]] [#allocation14]
          $region28: #{tpu_custom_call.1} parent=15 // pred_fallthru
            _
          %113 = shalt.err (0)
          %s115 = sshll.u32 %s105, 4
          %s116 = int_to_ptr.hbm [resolvable:$true] %s115
          %s117 = sshll.u32 %s106, 4
          %s118 = int_to_ptr.vmem [resolvable:$true] %s117
          %120 = dma.hbm_to_vmem [thread:$0]  %s116, 16, %s118, %s107
          %s121 = sld [smem:[#allocation5 + $0x3]]
          %s122 = scalar_lea.hbm %s1, %s121
          %s123 = scalar_lea.vmem [#allocation2], 3
          %s124 = scalar_lea.sflag [#allocation3], 3
          // Predicated region
          $region29: #{tpu_custom_call.1} parent=15 // pred_check
            _
          $region30: #{tpu_custom_call.1} parent=15 // pred_check_branch
            %126 = sbr.rel target = $region32
          $region31: #{tpu_custom_call.1} parent=15 // pred_region
            %127 = sst [smem:[#allocation10]] [#allocation17]
            %128 = sst [smem:[#allocation11]] [#allocation16]
          $region32: #{tpu_custom_call.1} parent=15 // pred_fallthru
            _
          %130 = shalt.err (0)
          %s132 = sshll.u32 %s122, 4
          %s133 = int_to_ptr.hbm [resolvable:$true] %s132
          %s134 = sshll.u32 %s123, 4
          %s135 = int_to_ptr.vmem [resolvable:$true] %s134
          %137 = dma.hbm_to_vmem [thread:$0]  %s133, 16, %s135, %s124
          %s138 = sld [smem:[#allocation5 + $0x4]]
          %s139 = scalar_lea.hbm %s1, %s138
          %s140 = scalar_lea.vmem [#allocation2], 4
          %s141 = scalar_lea.sflag [#allocation3], 4
          // Predicated region
          $region33: #{tpu_custom_call.1} parent=15 // pred_check
            _
          $region34: #{tpu_custom_call.1} parent=15 // pred_check_branch
            %143 = sbr.rel target = $region36
          $region35: #{tpu_custom_call.1} parent=15 // pred_region
            %144 = sst [smem:[#allocation10]] [#allocation19]
            %145 = sst [smem:[#allocation11]] [#allocation18]
          $region36: #{tpu_custom_call.1} parent=15 // pred_fallthru
            _
          %147 = shalt.err (0)
          %s149 = sshll.u32 %s139, 4
          %s150 = int_to_ptr.hbm [resolvable:$true] %s149
          %s151 = sshll.u32 %s140, 4
          %s152 = int_to_ptr.vmem [resolvable:$true] %s151
          %154 = dma.hbm_to_vmem [thread:$0]  %s150, 16, %s152, %s141
          %s155 = sld [smem:[#allocation5 + $0x5]]
          %s156 = scalar_lea.hbm %s1, %s155
          %s157 = scalar_lea.vmem [#allocation2], 5
          %s158 = scalar_lea.sflag [#allocation3], 5
          // Predicated region
          $region37: #{tpu_custom_call.1} parent=15 // pred_check
            _
          $region38: #{tpu_custom_call.1} parent=15 // pred_check_branch
            %160 = sbr.rel target = $region40
          $region39: #{tpu_custom_call.1} parent=15 // pred_region
            %161 = sst [smem:[#allocation10]] [#allocation21]
            %162 = sst [smem:[#allocation11]] [#allocation20]
          $region40: #{tpu_custom_call.1} parent=15 // pred_fallthru
            _
          %164 = shalt.err (0)
          %s166 = sshll.u32 %s156, 4
          %s167 = int_to_ptr.hbm [resolvable:$true] %s166
          %s168 = sshll.u32 %s157, 4
          %s169 = int_to_ptr.vmem [resolvable:$true] %s168
          %171 = dma.hbm_to_vmem [thread:$0]  %s167, 16, %s169, %s158
          %s172 = sld [smem:[#allocation5 + $0x6]]
          %s173 = scalar_lea.hbm %s1, %s172
          %s174 = scalar_lea.vmem [#allocation2], 6
          %s175 = scalar_lea.sflag [#allocation3], 6
          // Predicated region
          $region41: #{tpu_custom_call.1} parent=15 // pred_check
            _
          $region42: #{tpu_custom_call.1} parent=15 // pred_check_branch
            %177 = sbr.rel target = $region44
          $region43: #{tpu_custom_call.1} parent=15 // pred_region
            %178 = sst [smem:[#allocation10]] [#allocation23]
            %179 = sst [smem:[#allocation11]] [#allocation22]
          $region44: #{tpu_custom_call.1} parent=15 // pred_fallthru
            _
          %181 = shalt.err (0)
          %s183 = sshll.u32 %s173, 4
          %s184 = int_to_ptr.hbm [resolvable:$true] %s183
          %s185 = sshll.u32 %s174, 4
          %s186 = int_to_ptr.vmem [resolvable:$true] %s185
          %188 = dma.hbm_to_vmem [thread:$0]  %s184, 16, %s186, %s175
          %s189 = sld [smem:[#allocation5 + $0x7]]
          %s190 = scalar_lea.hbm %s1, %s189
          %s191 = scalar_lea.vmem [#allocation2], 7
          %s192 = scalar_lea.sflag [#allocation3], 7
          // Predicated region
          $region45: #{tpu_custom_call.1} parent=15 // pred_check
            _
          $region46: #{tpu_custom_call.1} parent=15 // pred_check_branch
            %194 = sbr.rel target = $region48
          $region47: #{tpu_custom_call.1} parent=15 // pred_region
            %195 = sst [smem:[#allocation10]] [#allocation25]
            %196 = sst [smem:[#allocation11]] [#allocation24]
          $region48: #{tpu_custom_call.1} parent=15 // pred_fallthru
            _
          %198 = shalt.err (0)
          %s200 = sshll.u32 %s190, 4
          %s201 = int_to_ptr.hbm [resolvable:$true] %s200
          %s202 = sshll.u32 %s191, 4
          %s203 = int_to_ptr.vmem [resolvable:$true] %s202
          %205 = dma.hbm_to_vmem [thread:$0]  %s201, 16, %s203, %s192
        $region16: #{tpu_custom_call.1} parent=11 // pred_fallthru
          _
        %s206 = sadd.s32 %s19, 1
        %p207 = scmp.lt.s32.totalorder %s206, 2
        // Predicated region
        $region49: #{tpu_custom_call.1} parent=11 // pred_check
          %p208 = pneg %p207
        $region50: #{tpu_custom_call.1} parent=11 // pred_check_branch
          %210 = sbr.rel (%p208) target = $region52
        $region51: #{tpu_custom_call.1} parent=11 // pred_region
          %s211 = ssub.s32 1, %s67
          %s212 = smul.u32 %s206, 8
          %s213 = sld [smem:[#allocation5 + %s212]]
          %s214 = scalar_lea.hbm %s1, %s213
          %s215 = smul.u32 %s211, 8
          %s216 = scalar_lea.vmem [#allocation2], %s215
          %s217 = scalar_lea.sflag [#allocation3], %s215
          // Predicated region
          $region53: #{tpu_custom_call.1} parent=51 // pred_check
            _
          $region54: #{tpu_custom_call.1} parent=51 // pred_check_branch
            %219 = sbr.rel target = $region56
          $region55: #{tpu_custom_call.1} parent=51 // pred_region
            %220 = sst [smem:[#allocation10]] [#allocation27]
            %221 = sst [smem:[#allocation11]] [#allocation26]
          $region56: #{tpu_custom_call.1} parent=51 // pred_fallthru
            _
          %223 = shalt.err (0)
          %s225 = sshll.u32 %s214, 4
          %s226 = int_to_ptr.hbm [resolvable:$true] %s225
          %s227 = sshll.u32 %s216, 4
          %s228 = int_to_ptr.vmem [resolvable:$true] %s227
          %230 = dma.hbm_to_vmem [thread:$0]  %s226, 16, %s228, %s217
          %s231 = sadd.s32 %s212, 1
          %s232 = sld [smem:[#allocation5 + %s231]]
          %s233 = scalar_lea.hbm %s1, %s232
          %s234 = sadd.s32 1, %s215
          %s235 = scalar_lea.vmem [#allocation2], %s234
          %s236 = scalar_lea.sflag [#allocation3], %s234
          // Predicated region
          $region57: #{tpu_custom_call.1} parent=51 // pred_check
            _
          $region58: #{tpu_custom_call.1} parent=51 // pred_check_branch
            %238 = sbr.rel target = $region60
          $region59: #{tpu_custom_call.1} parent=51 // pred_region
            %239 = sst [smem:[#allocation10]] [#allocation29]
            %240 = sst [smem:[#allocation11]] [#allocation28]
          $region60: #{tpu_custom_call.1} parent=51 // pred_fallthru
            _
          %242 = shalt.err (0)
          %s244 = sshll.u32 %s233, 4
          %s245 = int_to_ptr.hbm [resolvable:$true] %s244
          %s246 = sshll.u32 %s235, 4
          %s247 = int_to_ptr.vmem [resolvable:$true] %s246
          %249 = dma.hbm_to_vmem [thread:$0]  %s245, 16, %s247, %s236
          %s250 = sadd.s32 %s212, 2
          %s251 = sld [smem:[#allocation5 + %s250]]
          %s252 = scalar_lea.hbm %s1, %s251
          %s253 = sadd.s32 2, %s215
          %s254 = scalar_lea.vmem [#allocation2], %s253
          %s255 = scalar_lea.sflag [#allocation3], %s253
          // Predicated region
          $region61: #{tpu_custom_call.1} parent=51 // pred_check
            _
          $region62: #{tpu_custom_call.1} parent=51 // pred_check_branch
            %257 = sbr.rel target = $region64
          $region63: #{tpu_custom_call.1} parent=51 // pred_region
            %258 = sst [smem:[#allocation10]] [#allocation31]
            %259 = sst [smem:[#allocation11]] [#allocation30]
          $region64: #{tpu_custom_call.1} parent=51 // pred_fallthru
            _
          %261 = shalt.err (0)
          %s263 = sshll.u32 %s252, 4
          %s264 = int_to_ptr.hbm [resolvable:$true] %s263
          %s265 = sshll.u32 %s254, 4
          %s266 = int_to_ptr.vmem [resolvable:$true] %s265
          %268 = dma.hbm_to_vmem [thread:$0]  %s264, 16, %s266, %s255
          %s269 = sadd.s32 %s212, 3
          %s270 = sld [smem:[#allocation5 + %s269]]
          %s271 = scalar_lea.hbm %s1, %s270
          %s272 = sadd.s32 3, %s215
          %s273 = scalar_lea.vmem [#allocation2], %s272
          %s274 = scalar_lea.sflag [#allocation3], %s272
          // Predicated region
          $region65: #{tpu_custom_call.1} parent=51 // pred_check
            _
          $region66: #{tpu_custom_call.1} parent=51 // pred_check_branch
            %276 = sbr.rel target = $region68
          $region67: #{tpu_custom_call.1} parent=51 // pred_region
            %277 = sst [smem:[#allocation10]] [#allocation33]
            %278 = sst [smem:[#allocation11]] [#allocation32]
          $region68: #{tpu_custom_call.1} parent=51 // pred_fallthru
            _
          %280 = shalt.err (0)
          %s282 = sshll.u32 %s271, 4
          %s283 = int_to_ptr.hbm [resolvable:$true] %s282
          %s284 = sshll.u32 %s273, 4
          %s285 = int_to_ptr.vmem [resolvable:$true] %s284
          %287 = dma.hbm_to_vmem [thread:$0]  %s283, 16, %s285, %s274
          %s288 = sadd.s32 %s212, 4
          %s289 = sld [smem:[#allocation5 + %s288]]
          %s290 = scalar_lea.hbm %s1, %s289
          %s291 = sadd.s32 4, %s215
          %s292 = scalar_lea.vmem [#allocation2], %s291
          %s293 = scalar_lea.sflag [#allocation3], %s291
          // Predicated region
          $region69: #{tpu_custom_call.1} parent=51 // pred_check
            _
          $region70: #{tpu_custom_call.1} parent=51 // pred_check_branch
            %295 = sbr.rel target = $region72
          $region71: #{tpu_custom_call.1} parent=51 // pred_region
            %296 = sst [smem:[#allocation10]] [#allocation35]
            %297 = sst [smem:[#allocation11]] [#allocation34]
          $region72: #{tpu_custom_call.1} parent=51 // pred_fallthru
            _
          %299 = shalt.err (0)
          %s301 = sshll.u32 %s290, 4
          %s302 = int_to_ptr.hbm [resolvable:$true] %s301
          %s303 = sshll.u32 %s292, 4
          %s304 = int_to_ptr.vmem [resolvable:$true] %s303
          %306 = dma.hbm_to_vmem [thread:$0]  %s302, 16, %s304, %s293
          %s307 = sadd.s32 %s212, 5
          %s308 = sld [smem:[#allocation5 + %s307]]
          %s309 = scalar_lea.hbm %s1, %s308
          %s310 = sadd.s32 5, %s215
          %s311 = scalar_lea.vmem [#allocation2], %s310
          %s312 = scalar_lea.sflag [#allocation3], %s310
          // Predicated region
          $region73: #{tpu_custom_call.1} parent=51 // pred_check
            _
          $region74: #{tpu_custom_call.1} parent=51 // pred_check_branch
            %314 = sbr.rel target = $region76
          $region75: #{tpu_custom_call.1} parent=51 // pred_region
            %315 = sst [smem:[#allocation10]] [#allocation37]
            %316 = sst [smem:[#allocation11]] [#allocation36]
          $region76: #{tpu_custom_call.1} parent=51 // pred_fallthru
            _
          %318 = shalt.err (0)
          %s320 = sshll.u32 %s309, 4
          %s321 = int_to_ptr.hbm [resolvable:$true] %s320
          %s322 = sshll.u32 %s311, 4
          %s323 = int_to_ptr.vmem [resolvable:$true] %s322
          %325 = dma.hbm_to_vmem [thread:$0]  %s321, 16, %s323, %s312
          %s326 = sadd.s32 %s212, 6
          %s327 = sld [smem:[#allocation5 + %s326]]
          %s328 = scalar_lea.hbm %s1, %s327
          %s329 = sadd.s32 6, %s215
          %s330 = scalar_lea.vmem [#allocation2], %s329
          %s331 = scalar_lea.sflag [#allocation3], %s329
          // Predicated region
          $region77: #{tpu_custom_call.1} parent=51 // pred_check
            _
          $region78: #{tpu_custom_call.1} parent=51 // pred_check_branch
            %333 = sbr.rel target = $region80
          $region79: #{tpu_custom_call.1} parent=51 // pred_region
            %334 = sst [smem:[#allocation10]] [#allocation39]
            %335 = sst [smem:[#allocation11]] [#allocation38]
          $region80: #{tpu_custom_call.1} parent=51 // pred_fallthru
            _
          %337 = shalt.err (0)
          %s339 = sshll.u32 %s328, 4
          %s340 = int_to_ptr.hbm [resolvable:$true] %s339
          %s341 = sshll.u32 %s330, 4
          %s342 = int_to_ptr.vmem [resolvable:$true] %s341
          %344 = dma.hbm_to_vmem [thread:$0]  %s340, 16, %s342, %s331
          %s345 = sadd.s32 %s212, 7
          %s346 = sld [smem:[#allocation5 + %s345]]
          %s347 = scalar_lea.hbm %s1, %s346
          %s348 = sadd.s32 7, %s215
          %s349 = scalar_lea.vmem [#allocation2], %s348
          %s350 = scalar_lea.sflag [#allocation3], %s348
          // Predicated region
          $region81: #{tpu_custom_call.1} parent=51 // pred_check
            _
          $region82: #{tpu_custom_call.1} parent=51 // pred_check_branch
            %352 = sbr.rel target = $region84
          $region83: #{tpu_custom_call.1} parent=51 // pred_region
            %353 = sst [smem:[#allocation10]] [#allocation41]
            %354 = sst [smem:[#allocation11]] [#allocation40]
          $region84: #{tpu_custom_call.1} parent=51 // pred_fallthru
            _
          %356 = shalt.err (0)
          %s358 = sshll.u32 %s347, 4
          %s359 = int_to_ptr.hbm [resolvable:$true] %s358
          %s360 = sshll.u32 %s349, 4
          %s361 = int_to_ptr.vmem [resolvable:$true] %s360
          %363 = dma.hbm_to_vmem [thread:$0]  %s359, 16, %s361, %s350
        $region52: #{tpu_custom_call.1} parent=11 // pred_fallthru
          _
        %s364 = smul.u32 %s67, 8
        %s365 = scalar_lea.sflag [#allocation3], %s364
        %s366 = smul.u32 1, 1
        %s367 = sshll.u32 %s366, 4
        %368 = dma.done %s365, %s367
        %s369 = sadd.s32 1, %s364
        %s370 = scalar_lea.sflag [#allocation3], %s369
        %s371 = sshll.u32 %s366, 4
        %372 = dma.done %s370, %s371
        %s373 = sadd.s32 2, %s364
        %s374 = scalar_lea.sflag [#allocation3], %s373
        %s375 = sshll.u32 %s366, 4
        %376 = dma.done %s374, %s375
        %s377 = sadd.s32 3, %s364
        %s378 = scalar_lea.sflag [#allocation3], %s377
        %s379 = sshll.u32 %s366, 4
        %380 = dma.done %s378, %s379
        %s381 = sadd.s32 4, %s364
        %s382 = scalar_lea.sflag [#allocation3], %s381
        %s383 = sshll.u32 %s366, 4
        %384 = dma.done %s382, %s383
        %s385 = sadd.s32 5, %s364
        %s386 = scalar_lea.sflag [#allocation3], %s385
        %s387 = sshll.u32 %s366, 4
        %388 = dma.done %s386, %s387
        %s389 = sadd.s32 6, %s364
        %s390 = scalar_lea.sflag [#allocation3], %s389
        %s391 = sshll.u32 %s366, 4
        %392 = dma.done %s390, %s391
        %s393 = sadd.s32 7, %s364
        %s394 = scalar_lea.sflag [#allocation3], %s393
        %s395 = sshll.u32 %s366, 4
        %396 = dma.done %s394, %s395
        %s397 = scalar_lea.vmem [#allocation2], %s364
        %v398 = vld [vmem:[%s397] sm:$0xff]
        %399 = vst [vmem:[%s55] sm:$0xff] %v398
        %s400 = sand.u32 %s28, 1
        %s401 = scalar_lea.sflag [#allocation7], %s400
        %s402 = sand.u32 %s28, 1
        %s403 = smul.addr %s402, 8
        %s404 = scalar_lea.vmem [#allocation6], %s403
        // Predicated region
        $region85: #{tpu_custom_call.1} parent=11 // pred_check
          %p405 = pneg %p34
        $region86: #{tpu_custom_call.1} parent=11 // pred_check_branch
          %407 = sbr.rel (%p405) target = $region88
        $region87: #{tpu_custom_call.1} parent=11 // pred_region
          %409 = vsyncadd %s401, 0
          %s410 = smul.addr %s19, 8
          %s411 = scalar_lea.hbm %s2, %s410
          %s413 = sshll.u32 %s404, 4
          %s414 = int_to_ptr.vmem [resolvable:$true] %s413
          %s415 = sshll.u32 %s411, 4
          %s416 = int_to_ptr.hbm [resolvable:$true] %s415
          %418 = dma.vmem_to_hbm [thread:$0]  %s414, 128, %s416, %s401
        $region88: #{tpu_custom_call.1} parent=11 // pred_fallthru
          _
      $region12: #{tpu_custom_call.1} parent=5 // pred_fallthru
        _
      %p419 = scmp.le.s32.totalorder 1, %s19
      // Predicated region
      $region89: #{tpu_custom_call.1} parent=5 // pred_check
        %p420 = pneg %p419
      $region90: #{tpu_custom_call.1} parent=5 // pred_check_branch
        %422 = sbr.rel (%p420) target = $region92
      $region91: #{tpu_custom_call.1} parent=5 // pred_region
        %s423 = ssub.s32 %s19, 1
        // Predicated region
        $region93: #{tpu_custom_call.1} parent=91 // pred_check
          %p424 = pneg %p40
        $region94: #{tpu_custom_call.1} parent=91 // pred_check_branch
          %426 = sbr.rel (%p424) target = $region96
        $region95: #{tpu_custom_call.1} parent=91 // pred_region
          %s427 = sand.u32 %s31, 1
          %s428 = scalar_lea.sflag [#allocation7], %s427
          %s429 = sand.u32 %s31, 1
          %s430 = smul.addr %s429, 8
          %s431 = scalar_lea.vmem [#allocation6], %s430
          %433 = dma.done %s428, 128
        $region96: #{tpu_custom_call.1} parent=91 // pred_fallthru
          _
      $region92: #{tpu_custom_call.1} parent=5 // pred_fallthru
        _
    $region6: #{tpu_custom_call.1} parent=1 // loop_footer
      %s23 = sadd.s32 1, %s19
    $region7: #{tpu_custom_call.1} parent=1 // loop_footer_branch
      %18 = sbr.rel target = $region3
    $region8: #{tpu_custom_call.1} parent=1 // loop_exit
      _
    %434 = vsyncpa [#allocation7], 1
    %s435 = scalar_lea.sflag [#allocation7], 1
    %436 = vsyncpa %s435, 1
  %437 = vsyncmov [#allocation3]
  %s438 = vpop.sfrf %437
  %p439 = scmp.eq.s32.totalorder %s438, 0
  %p440 = pneg %p439
  %442 = shalt.err (%p440)
  %s443 = scalar_lea.sflag [#allocation3], 1
  %444 = vsyncmov %s443
  %s445 = vpop.sfrf %444
  %p446 = scmp.eq.s32.totalorder %s445, 0
  %p447 = pneg %p446
  %449 = shalt.err (%p447)
  %s450 = scalar_lea.sflag [#allocation3], 2
  %451 = vsyncmov %s450
  %s452 = vpop.sfrf %451
  %p453 = scmp.eq.s32.totalorder %s452, 0
  %p454 = pneg %p453
  %456 = shalt.err (%p454)
  %s457 = scalar_lea.sflag [#allocation3], 3
  %458 = vsyncmov %s457
  %s459 = vpop.sfrf %458
  %p460 = scmp.eq.s32.totalorder %s459, 0
  %p461 = pneg %p460
  %463 = shalt.err (%p461)
  %s464 = scalar_lea.sflag [#allocation3], 4
  %465 = vsyncmov %s464
  %s466 = vpop.sfrf %465
  %p467 = scmp.eq.s32.totalorder %s466, 0
  %p468 = pneg %p467
  %470 = shalt.err (%p468)
  %s471 = scalar_lea.sflag [#allocation3], 5
  %472 = vsyncmov %s471
  %s473 = vpop.sfrf %472
  %p474 = scmp.eq.s32.totalorder %s473, 0
  %p475 = pneg %p474
  %477 = shalt.err (%p475)
  %s478 = scalar_lea.sflag [#allocation3], 6
  %479 = vsyncmov %s478
  %s480 = vpop.sfrf %479
  %p481 = scmp.eq.s32.totalorder %s480, 0
  %p482 = pneg %p481
  %484 = shalt.err (%p482)
  %s485 = scalar_lea.sflag [#allocation3], 7
  %486 = vsyncmov %s485
  %s487 = vpop.sfrf %486
  %p488 = scmp.eq.s32.totalorder %s487, 0
  %p489 = pneg %p488
  %491 = shalt.err (%p489)
  %s492 = scalar_lea.sflag [#allocation3], 8
  %493 = vsyncmov %s492
  %s494 = vpop.sfrf %493
  %p495 = scmp.eq.s32.totalorder %s494, 0
  %p496 = pneg %p495
  %498 = shalt.err (%p496)
  %s499 = scalar_lea.sflag [#allocation3], 9
  %500 = vsyncmov %s499
  %s501 = vpop.sfrf %500
  %p502 = scmp.eq.s32.totalorder %s501, 0
  %p503 = pneg %p502
  %505 = shalt.err (%p503)
  %s506 = scalar_lea.sflag [#allocation3], 10
  %507 = vsyncmov %s506
  %s508 = vpop.sfrf %507
  %p509 = scmp.eq.s32.totalorder %s508, 0
  %p510 = pneg %p509
  %512 = shalt.err (%p510)
  %s513 = scalar_lea.sflag [#allocation3], 11
  %514 = vsyncmov %s513
  %s515 = vpop.sfrf %514
  %p516 = scmp.eq.s32.totalorder %s515, 0
  %p517 = pneg %p516
  %519 = shalt.err (%p517)
  %s520 = scalar_lea.sflag [#allocation3], 12
  %521 = vsyncmov %s520
  %s522 = vpop.sfrf %521
  %p523 = scmp.eq.s32.totalorder %s522, 0
  %p524 = pneg %p523
  %526 = shalt.err (%p524)
  %s527 = scalar_lea.sflag [#allocation3], 13
  %528 = vsyncmov %s527
  %s529 = vpop.sfrf %528
  %p530 = scmp.eq.s32.totalorder %s529, 0
  %p531 = pneg %p530
  %533 = shalt.err (%p531)
  %s534 = scalar_lea.sflag [#allocation3], 14
  %535 = vsyncmov %s534
  %s536 = vpop.sfrf %535
  %p537 = scmp.eq.s32.totalorder %s536, 0
  %p538 = pneg %p537
  %540 = shalt.err (%p538)
  %s541 = scalar_lea.sflag [#allocation3], 15
  %542 = vsyncmov %s541
  %s543 = vpop.sfrf %542
  %p544 = scmp.eq.s32.totalorder %s543, 0
  %p545 = pneg %p544
  %547 = shalt.err (%p545)

</llo_original>
